<compile_context>
chip_gen: v5e
topology: v5e:2x2
jax: 0.10.0
libtpu: 0.0.40
codegen_flags: <defaults>
</compile_context>

<pallas_src>
import functools

import jax
import jax.numpy as jnp
from jax.experimental import pallas as pl
from jax.experimental.pallas import tpu as pltpu


def _softshrink_kernel(x_ref, o_ref, *, lambd):
    x = x_ref[...]
    zero = jnp.zeros_like(x)
    o_ref[...] = jnp.where(
        x > lambd, x - lambd, jnp.where(x < -lambd, x + lambd, zero)
    )


def _softshrink_jnp(x, lambd):
    # Pure-jnp reference (also used for the < 128-element ragged tail).
    return jnp.where(
        x > lambd, x - lambd, jnp.where(x < -lambd, x + lambd, jnp.zeros_like(x))
    )


def _round_up(a, b):
    return ((a + b - 1) // b) * b


def _round_down(a, b):
    return (a // b) * b


@functools.lru_cache(maxsize=1)
def _chip_kind():
    try:
        return jax.devices()[0].device_kind.lower()
    except Exception:  # pragma: no cover - defensive only
        return ""


def softshrink(x, lambd=0.5):
    """Elementwise soft-shrinkage matching the reference nested torch.where."""
    orig_shape = x.shape
    orig_dtype = x.dtype
    n = x.size
    if n == 0:
        return x

    lane = 128
    itemsize = jnp.dtype(orig_dtype).itemsize
    # dtype-aware sublane multiple: 32-bit -> 8, 16-bit -> 16, 8-bit -> 32
    sub = {4: 8, 2: 16, 1: 32}.get(itemsize, 8)

    kind = _chip_kind()
    is_v7 = ("v7" in kind) or ("7x" in kind)
    is_pre_v7 = any(s in kind for s in ("v2", "v3", "v4", "v5", "v6"))
    # Per-buffer cap: 4 MiB on v7x / unknown (64 MiB physical VMEM),
    # 8 MiB on v5e/v6e (128 MiB physical VMEM).
    per_buf_cap = (8 << 20) if (is_pre_v7 and not is_v7) else (4 << 20)
    vmem_ceiling = (64 << 20) if (is_pre_v7 and not is_v7) else (32 << 20)

    # Split the flat array into a 128-aligned bulk (kernel) and a tiny tail
    # (plain jnp) -- no full-array pad / slice-back copies.
    x_flat = jnp.reshape(x, (-1,))
    bulk = _round_down(n, lane)
    tail = n - bulk

    out_bulk_flat = None
    if bulk:
        rows = bulk // lane
        x2d = jnp.reshape(x_flat if tail == 0 else x_flat[:bulk], (rows, lane))

        # Row-tile size, derived directly from the per-buffer VMEM cap.
        if rows <= sub:
            tr = rows  # full-extent block (allowed even if < sublane multiple)
        else:
            max_tr = _round_down(per_buf_cap // (lane * itemsize), sub) or sub
            tr = min(max_tr, rows)
            if tr < rows:
                tr = _round_down(tr, sub) or sub  # keep packed, unmasked tiles

        # v7x only: make sure both TensorCores get >= 2 pipelined steps each
        # (grid >= 4), but only when the input is big enough to be worth it.
        if is_v7 and rows * lane * itemsize >= (1 << 20):
            if pl.cdiv(rows, tr) < 4:
                tr4 = max(_round_up(pl.cdiv(rows, 4), sub), sub)
                if tr4 < tr:
                    tr = tr4

        grid = (pl.cdiv(rows, tr),)  # ragged last block handled by Pallas masking

        block_bytes = tr * lane * itemsize
        vmem_limit = min(max(4 * block_bytes + (1 << 20), 4 << 20), vmem_ceiling)

        out2d = pl.pallas_call(
            lambda x_ref, o_ref: _softshrink_kernel(x_ref, o_ref, lambd=lambd),
            out_shape=jax.ShapeDtypeStruct((rows, lane), orig_dtype),
            grid_spec=pltpu.PrefetchScalarGridSpec(
                num_scalar_prefetch=0,
                grid=grid,
                in_specs=[pl.BlockSpec((tr, lane), lambda i: (i, 0))],
                out_specs=pl.BlockSpec((tr, lane), lambda i: (i, 0)),
            ),
            compiler_params=pltpu.CompilerParams(
                dimension_semantics=("parallel",),
                vmem_limit_bytes=vmem_limit,
            ),
        )(x2d)
        out_bulk_flat = jnp.reshape(out2d, (-1,))

    if tail:
        out_tail = _softshrink_jnp(x_flat[bulk:], lambd)
        out_flat = (
            out_tail
            if out_bulk_flat is None
            else jnp.concatenate([out_bulk_flat, out_tail])
        )
    else:
        out_flat = out_bulk_flat

    return jnp.reshape(out_flat, orig_shape)


if __name__ == "__main__":
    key = jax.random.PRNGKey(0)
    x = jax.random.normal(key, (2, 4, 16, 16), dtype=jnp.float32)
    lambd = 0.5

    out = jax.block_until_ready(softshrink(x, lambd))
    ref = _softshrink_jnp(x, lambd)
    assert out.shape == x.shape and out.dtype == x.dtype
    assert jnp.allclose(out, ref, atol=1e-6, rtol=1e-6)

    # Ragged-size sanity check (exercises the 128-aligned bulk + jnp tail path).
    x2 = jax.random.normal(jax.random.PRNGKey(1), (3, 5, 9), dtype=jnp.float32)
    out2 = jax.block_until_ready(softshrink(x2, lambd))
    assert jnp.allclose(out2, _softshrink_jnp(x2, lambd), atol=1e-6, rtol=1e-6)

    print("KERNEL_OK")
</pallas_src>

<mosaic_0001>
module attributes {stable_mosaic.version = 11 : i64} {
  func.func @_lambda_(%arg0: i32, %arg1: memref<16x128xf32, #tpu.memory_space<vmem>>, %arg2: memref<16x128xf32, #tpu.memory_space<vmem>>) attributes {dimension_semantics = [#tpu.dimension_semantics<parallel>], iteration_bounds = array<i64: 1>, scalar_prefetch = 0 : i64, scratch_operands = 0 : i64, tpu.core_type = #tpu.core_type<tc>, window_params = [{transform_indices = @transform_0, window_bounds = array<i64: 16, 128>}, {transform_indices = @transform_1, window_bounds = array<i64: 16, 128>}]} {
    %c0 = arith.constant 0 : index
    %c0_0 = arith.constant 0 : index
    %0 = vector.load %arg1[%c0, %c0_0] : memref<16x128xf32, #tpu.memory_space<vmem>>, vector<16x128xf32>
    %cst = arith.constant 0.000000e+00 : f32
    %1 = vector.broadcast %cst : f32 to vector<16x128xf32>
    %cst_1 = arith.constant 5.000000e-01 : f32
    %2 = vector.broadcast %cst_1 : f32 to vector<16x128xf32>
    %3 = arith.cmpf ogt, %0, %2 : vector<16x128xf32>
    %cst_2 = arith.constant 5.000000e-01 : f32
    %4 = vector.broadcast %cst_2 : f32 to vector<16x128xf32>
    %5 = arith.subf %0, %4 : vector<16x128xf32>
    %cst_3 = arith.constant -5.000000e-01 : f32
    %6 = vector.broadcast %cst_3 : f32 to vector<16x128xf32>
    %7 = arith.cmpf olt, %0, %6 : vector<16x128xf32>
    %cst_4 = arith.constant 5.000000e-01 : f32
    %8 = vector.broadcast %cst_4 : f32 to vector<16x128xf32>
    %9 = arith.addf %0, %8 : vector<16x128xf32>
    %10 = arith.select %7, %9, %1 : vector<16x128xi1>, vector<16x128xf32>
    %11 = arith.select %3, %5, %10 : vector<16x128xi1>, vector<16x128xf32>
    %c0_5 = arith.constant 0 : index
    %c0_6 = arith.constant 0 : index
    %12 = vector.load %arg2[%c0_5, %c0_6] : memref<16x128xf32, #tpu.memory_space<vmem>>, vector<16x128xf32>
    tpu.vector_store %arg2[%c0_5, %c0_6], %11 {strides = array<i32>} : memref<16x128xf32, #tpu.memory_space<vmem>>, vector<16x128xf32>,
    return
  }
  func.func @transform_0(%arg0: i32) -> (i32, i32) {
    %c0_i32 = arith.constant 0 : i32
    %c0_i32_0 = arith.constant 0 : i32
    return %arg0, %c0_i32 : i32, i32
  }
  func.func @transform_1(%arg0: i32) -> (i32, i32) {
    %c0_i32 = arith.constant 0 : i32
    %c0_i32_0 = arith.constant 0 : i32
    return %arg0, %c0_i32 : i32, i32
  }
}

</mosaic_0001>

<llo_original>
// kernel: tpu_custom_call.1
$region0: #{tpu_custom_call.1}
  #allocation0 [shape = 'u32[]', space=smem, size = 0x4, offset = 0x4, fixed_abs, tag = 'smem constant byte address 0x4 - core index']
  #allocation1 [shape = 'u32[72,128]{1,0:T(1,128)}', space=vmem, size = 0x9000, scoped, tag = 'internal scratch']
  %s0 = inlined_call_operand.hbm [shape: f32[16,128], index: 0, kind: input, shape index: {}]
  %s1 = inlined_call_operand.hbm [shape: f32[16,128], index: 1, kind: output, shape index: {}]
  %s2 = sld [smem:[#allocation0]]
  $region18: #{tpu_custom_call.1} parent=0
    _
  %s4 = ssub.s32 1, %s2
  %s5 = scalar_select 0, %s4, %s2
  $region1: #{tpu_custom_call.1} parent=0
    #allocation2 [shape = 'u8[8192]{0}', space=vmem, size = 0x2000, scoped, tag = 'input window, operand 0, single buffered']
    #allocation3 [shape = 's32[1]{0}', space=sflag, size = 0x4, scoped, tag = 'scoped memory for tpu_custom_call.1']
    #allocation4 [shape = 's32[1]{0}', space=sflag, size = 0x4, scoped, tag = 'scoped memory for tpu_custom_call.1']
    #allocation5 [shape = 'u8[8192]{0}', space=vmem, size = 0x2000, scoped, tag = 'output window, operand 0, single buffered']
    %6 = vsyncpa [#allocation3], 0
    %7 = vsyncpa [#allocation4], 0
    // Predicated region
    $region2: #{tpu_custom_call.1} parent=1 // pred_check
      _
    $region3: #{tpu_custom_call.1} parent=1 // pred_check_branch
      %9 = sbr.rel (0) target = $region5
    $region4: #{tpu_custom_call.1} parent=1 // pred_region
      %11 = vsyncadd [#allocation3], 0
      %s12 = sshll.u32 %s0, 4
      %s13 = int_to_ptr.hbm [resolvable:$true] %s12
      %s14 = sshll.u32 [#allocation2], 4
      %s15 = int_to_ptr.vmem [resolvable:$true] %s14
      %20 = dma.hbm_to_vmem [thread:$0]  %s13, 256, %s15, [#allocation3], 128, 128, 8
    $region5: #{tpu_custom_call.1} parent=1 // pred_fallthru
      _
    // Predicated region
    $region6: #{tpu_custom_call.1} parent=1 // pred_check
      _
    $region7: #{tpu_custom_call.1} parent=1 // pred_check_branch
      %22 = sbr.rel (0) target = $region9
    $region8: #{tpu_custom_call.1} parent=1 // pred_region
      %24 = dma.done [#allocation3], 256
    $region9: #{tpu_custom_call.1} parent=1 // pred_fallthru
      _
    %v25 = vld [vmem:[#allocation2] sm:$0xff]
    %v26 = vld [vmem:[#allocation2 + $0x8] sm:$0xff]
    %vm27 = vcmp.gt.f32.partialorder %v25, 0.5
    %vm28 = vcmp.gt.f32.partialorder %v26, 0.5
    %v29 = vsub.f32 %v25, 0.5
    %v30 = vsub.f32 %v26, 0.5
    %vm31 = vcmp.lt.f32.partialorder %v25, -0.5
    %vm32 = vcmp.lt.f32.partialorder %v26, -0.5
    %v33 = vadd.f32 %v25, 0.5
    %v34 = vadd.f32 %v26, 0.5
    %v35 = vsel %vm31, %v33, 0.0
    %v36 = vsel %vm32, %v34, 0.0
    %v37 = vsel %vm27, %v29, %v35
    %v38 = vsel %vm28, %v30, %v36
    %39 = vst [vmem:[#allocation5] sm:$0xff] %v37
    %40 = vst [vmem:[#allocation5 + $0x8] sm:$0xff] %v38
    // Predicated region
    $region10: #{tpu_custom_call.1} parent=1 // pred_check
      _
    $region11: #{tpu_custom_call.1} parent=1 // pred_check_branch
      %42 = sbr.rel (0) target = $region13
    $region12: #{tpu_custom_call.1} parent=1 // pred_region
      %44 = vsyncadd [#allocation4], 0
      %s45 = sshll.u32 [#allocation5], 4
      %s46 = int_to_ptr.vmem [resolvable:$true] %s45
      %s47 = sshll.u32 %s1, 4
      %s48 = int_to_ptr.hbm [resolvable:$true] %s47
      %53 = dma.vmem_to_hbm [thread:$0]  %s46, 256, %s48, [#allocation4], 128, 128, 8
    $region13: #{tpu_custom_call.1} parent=1 // pred_fallthru
      _
    // Predicated region
    $region14: #{tpu_custom_call.1} parent=1 // pred_check
      _
    $region15: #{tpu_custom_call.1} parent=1 // pred_check_branch
      %55 = sbr.rel (0) target = $region17
    $region16: #{tpu_custom_call.1} parent=1 // pred_region
      %57 = dma.done [#allocation4], 256
    $region17: #{tpu_custom_call.1} parent=1 // pred_fallthru
      _
    %58 = vsyncpa [#allocation3], 1
    %59 = vsyncpa [#allocation4], 1

</llo_original>
